<compile_context>
chip_gen: v5e
topology: v5e:2x2
jax: 0.10.0
libtpu: 0.0.40
codegen_flags: <defaults>
</compile_context>

<pallas_src>
import jax
import jax.numpy as jnp
from jax import lax
from jax.experimental import pallas as pl
from jax.experimental.pallas import tpu as pltpu


def _round_up(n, k):
    return ((n + k - 1) // k) * k


def _cdiv(a, b):
    return (a + b - 1) // b


# Problems whose x is smaller than this run through plain XLA (launch overhead
# of the kernel + separate factorization op dominates at that size).
_KERNEL_MIN_X_BYTES = 256 * 1024


def _tcr_reference(x, random_matrix, eps):
    """Plain-XLA forward pass (also the tiny-problem fallback)."""
    m = x.shape[0]
    p = random_matrix.shape[1]
    xp = jnp.dot(x.astype(jnp.float32), random_matrix.astype(jnp.float32),
                 precision=lax.Precision.HIGHEST)
    G = jnp.dot(xp.T, xp, precision=lax.Precision.HIGHEST)
    M = jnp.eye(p, dtype=jnp.float32) + (p / (m * eps)) * G
    return -0.5 * jnp.linalg.slogdet(M)[1]


def _make_gram_kernel(*, tm, m, steps_per_core, needs_mask):
    """Builds the kernel that accumulates G = (x R)^T (x R) for one core."""

    def kernel(rt_ref, x_ref, g_ref):
        i = pl.program_id(1)          # m-tile step within this core's stream

        @pl.when(i == 0)
        def _init():
            g_ref[...] = jnp.zeros_like(g_ref)

        x = x_ref[...]
        if needs_mask:
            c = pl.program_id(0)
            tile = c * steps_per_core + i
            row = tile * tm + lax.broadcasted_iota(jnp.int32, x.shape, 0)
            x = jnp.where(row < m, x, jnp.asarray(0.0, dtype=x.dtype))

        # xp_t = (x @ R)^T computed directly in (p_pad, tm) layout by
        # contracting the shared d axis (last dim of both operands) -> the
        # MXU-native "A @ B^T" form; no LHS transpose is ever materialized.
        xp_t = lax.dot_general(
            rt_ref[...], x,
            dimension_numbers=(((1,), (1,)), ((), ())),
            preferred_element_type=jnp.float32,
        )
        # G += xp_t @ xp_t^T, again contracting the last (row) axis of both.
        g_ref[...] += lax.dot_general(
            xp_t, xp_t,
            dimension_numbers=(((1,), (1,)), ((), ())),
            preferred_element_type=jnp.float32,
        )

    return kernel


def _vmem_budget_bytes():
    """Per-chip VMEM budget: ~38 MiB on v7x (64 MiB), ~77 MiB on v5e/v6e."""
    try:
        cap = int(pltpu.get_tpu_info().vmem_capacity_bytes)
    except Exception:
        cap = 64 * 1024 * 1024  # conservative (v7x physical VMEM per TC)
    return min(int(cap * 0.6), 96 * 1024 * 1024)


def _choose_tm(m, d, p_pad, x_itemsize, r_itemsize, budget_bytes):
    """Largest row tile that fits the VMEM budget with everything resident."""
    fixed = (2 * p_pad * d * r_itemsize   # R^T, double-buffered by the pipeline
             + 2 * p_pad * p_pad * 4      # resident f32 output block
             + (2 << 20))                 # slack for Mosaic internal scratch
    # Per x-row cost: double-buffered x tile + masked-x temp + (p_pad,) f32
    # column of the projection intermediate.
    per_row = 3 * d * x_itemsize + p_pad * 4
    avail = budget_bytes - fixed
    if avail <= per_row * 128:
        # TODO(synk): tile over d / the projection dim when R itself (nearly)
        # fills VMEM; not needed for this module's configurations.
        return 128
    tm = avail // per_row
    return max(128, (tm // 128) * 128)


def total_coding_rate_with_projection(x, random_matrix, eps, *, tm=None):
    """Forward pass of TotalCodingRateWithProjection (returns scalar loss)."""
    m, d = x.shape
    d_r, p = random_matrix.shape
    assert d_r == d, (d_r, d)
    scale = p / (m * eps)

    x_bytes = m * d * jnp.dtype(x.dtype).itemsize
    if tm is None and x_bytes < _KERNEL_MIN_X_BYTES:
        # Tiny problem: single fused XLA expression beats kernel launch cost.
        return _tcr_reference(x, random_matrix, eps)

    # R in x's dtype (bf16 callers stream/compute at half the bytes; small,
    # documented deviation from the f32 torch buffer when x is bf16).
    r_dtype = x.dtype
    x_it = jnp.dtype(x.dtype).itemsize
    r_it = jnp.dtype(r_dtype).itemsize

    # Lane-dense projection dim: pad p up to a multiple of 128 (>= 128) with
    # zero rows of R^T; padded Gram rows/cols are exactly zero and get sliced
    # off before the logdet.
    p_pad = max(128, _round_up(p, 128))

    budget = _vmem_budget_bytes()
    if tm is None:
        tm = _choose_tm(m, d, p_pad, x_it, r_it, budget)
    tm = int(tm)
    tm = min(tm, m)                     # full-dim block is always legal
    if tm < m:
        tm = max(8, (tm // 8) * 8)

    nt = _cdiv(m, tm)                   # total m tiles
    num_splits = 2 if nt >= 2 else 1    # 2-way TensorCore split (v7x); a
    steps_per_core = _cdiv(nt, num_splits)   # harmless serial loop on 1-TC chips
    needs_mask = (num_splits * steps_per_core * tm) != m

    rt = random_matrix.T.astype(r_dtype)          # (p, d)
    if p_pad != p:
        rt = jnp.pad(rt, ((0, p_pad - p), (0, 0)))  # (p_pad, d)

    kernel = _make_gram_kernel(
        tm=tm, m=m, steps_per_core=steps_per_core, needs_mask=needs_mask)

    def x_index_map(c, i):
        t = c * steps_per_core + i
        # Fully out-of-range tiles (odd tile counts on the 2-way split) re-read
        # the last valid tile; the in-kernel row mask zeroes them entirely.
        return (jnp.minimum(t, nt - 1), 0)

    g_parts = pl.pallas_call(
        kernel,
        out_shape=jax.ShapeDtypeStruct((num_splits, p_pad, p_pad), jnp.float32),
        grid=(num_splits, steps_per_core),
        in_specs=[
            pl.BlockSpec((p_pad, d), lambda c, i: (0, 0)),   # R^T, resident
            pl.BlockSpec((tm, d), x_index_map),              # streamed x tile
        ],
        out_specs=pl.BlockSpec((None, p_pad, p_pad), lambda c, i: (c, 0, 0)),
        compiler_params=pltpu.CompilerParams(
            dimension_semantics=("parallel", "arbitrary"),
            vmem_limit_bytes=budget,
        ),
    )(rt, x)

    G = jnp.sum(g_parts, axis=0)[:p, :p]
    M = jnp.eye(p, dtype=jnp.float32) + jnp.float32(scale) * G
    # TODO(synk): logdet (LU/Cholesky factorization) has no Pallas TPU
    # primitive; the tiny (p, p) epilogue stays in XLA.
    return -0.5 * jnp.linalg.slogdet(M)[1]


if __name__ == "__main__":
    key = jax.random.PRNGKey(0)

    def make_inputs(k, m, d, p):
        kx, kr = jax.random.split(k)
        x = jax.random.normal(kx, (m, d), dtype=jnp.float32)
        # random_matrix ~ N(0, 1/sqrt(p)) as in the module's __init__.
        r = jax.random.normal(kr, (d, p), dtype=jnp.float32) / jnp.sqrt(
            jnp.float32(p))
        return x, r

    k1, k2, k3 = jax.random.split(key, 3)

    # (A) kernel path, forced small tile: multi-tile stream, tail-row masking,
    #     2-way core split with an even tile count.
    xa, ra = make_inputs(k1, 1000, 256, 80)
    eps_a = 0.2
    loss_a = total_coding_rate_with_projection(xa, ra, eps_a, tm=256)
    ref_a = _tcr_reference(xa, ra, eps_a)

    # (A2) same inputs, auto tile size (single fat full-m tile, no masking).
    loss_a2 = total_coding_rate_with_projection(xa, ra, eps_a)

    # (B) kernel path, p > 128 (padded to 256) and an odd tile count:
    #     exercises the fully-out-of-range tile clamp on the core split.
    xb, rb = make_inputs(k2, 600, 128, 200)
    eps_b = 0.1
    loss_b = total_coding_rate_with_projection(xb, rb, eps_b, tm=256)
    ref_b = _tcr_reference(xb, rb, eps_b)

    # (C) the shipped tiny config (m=8, input_dim=32, projection_dim=16):
    #     plain-XLA fallback path.
    xc, rc = make_inputs(k3, 8, 32, 16)
    eps_c = 0.2
    loss_c = total_coding_rate_with_projection(xc, rc, eps_c)
    ref_c = _tcr_reference(xc, rc, eps_c)

    jax.block_until_ready((loss_a, loss_a2, loss_b, loss_c))

    for name, got, want in [("A", loss_a, ref_a), ("A2", loss_a2, ref_a),
                            ("B", loss_b, ref_b), ("C", loss_c, ref_c)]:
        assert jnp.allclose(got, want, rtol=5e-3, atol=5e-2), (
            name, float(got), float(want))

    print("KERNEL_OK")
</pallas_src>

<mosaic_0001>
module attributes {stable_mosaic.version = 11 : i64} {
  func.func @kernel(%arg0: i32, %arg1: i32, %arg2: memref<128x256xf32, #tpu.memory_space<vmem>>, %arg3: memref<256x256xf32, #tpu.memory_space<vmem>>, %arg4: memref<1x128x128xf32, #tpu.memory_space<vmem>>) attributes {dimension_semantics = [#tpu.dimension_semantics<parallel>, #tpu.dimension_semantics<arbitrary>], iteration_bounds = array<i64: 2, 2>, scalar_prefetch = 0 : i64, scratch_operands = 0 : i64, tpu.core_type = #tpu.core_type<tc>, window_params = [{pipeline_mode = #tpu.pipeline_mode<synchronous>, transform_indices = @transform_0, window_bounds = array<i64: 128, 256>}, {transform_indices = @transform_1, window_bounds = array<i64: 256, 256>}, {transform_indices = @transform_2, window_bounds = array<i64: 1, 128, 128>}]} {
    %c0_i32 = arith.constant 0 : i32
    %0 = arith.cmpi eq, %arg1, %c0_i32 : i32
    %1 = arith.extui %0 : i1 to i32
    %c0_i32_0 = arith.constant 0 : i32
    %2 = arith.cmpi ne, %1, %c0_i32_0 : i32
    scf.if %2 {
      %cst_12 = arith.constant 0.000000e+00 : f32
      %23 = vector.broadcast %cst_12 : f32 to vector<128x128xf32>
      %c0_13 = arith.constant 0 : index
      %c0_14 = arith.constant 0 : index
      %c0_15 = arith.constant 0 : index
      %24 = vector.load %arg4[%c0_13, %c0_14, %c0_15] : memref<1x128x128xf32, #tpu.memory_space<vmem>>, vector<1x128x128xf32>
      %25 = vector.shape_cast %24 : vector<1x128x128xf32> to vector<128x128xf32>
      %26 = vector.shape_cast %23 : vector<128x128xf32> to vector<1x128x128xf32>
      tpu.vector_store %arg4[%c0_13, %c0_14, %c0_15], %26 {strides = array<i32>} : memref<1x128x128xf32, #tpu.memory_space<vmem>>, vector<1x128x128xf32>,
    } else {
    }
    %c0 = arith.constant 0 : index
    %c0_1 = arith.constant 0 : index
    %3 = vector.load %arg3[%c0, %c0_1] : memref<256x256xf32, #tpu.memory_space<vmem>>, vector<256x256xf32>
    %c2_i32 = arith.constant 2 : i32
    %4 = arith.muli %arg0, %c2_i32 : i32
    %5 = arith.addi %4, %arg1 : i32
    %c256_i32 = arith.constant 256 : i32
    %6 = arith.muli %5, %c256_i32 : i32
    %7 = tpu.iota {dimensions = array<i32: 0>} : vector<256x256xi32>
    %8 = vector.broadcast %6 : i32 to vector<256x256xi32>
    %9 = arith.addi %8, %7 : vector<256x256xi32>
    %c1000_i32 = arith.constant 1000 : i32
    %10 = vector.broadcast %c1000_i32 : i32 to vector<256x256xi32>
    %11 = arith.cmpi slt, %9, %10 : vector<256x256xi32>
    %cst = arith.constant 0.000000e+00 : f32
    %12 = vector.broadcast %cst : f32 to vector<256x256xf32>
    %13 = arith.select %11, %3, %12 : vector<256x256xi1>, vector<256x256xf32>
    %c0_2 = arith.constant 0 : index
    %c0_3 = arith.constant 0 : index
    %14 = vector.load %arg2[%c0_2, %c0_3] : memref<128x256xf32, #tpu.memory_space<vmem>>, vector<128x256xf32>
    %cst_4 = arith.constant dense<0.000000e+00> : vector<128x256xf32>
    %15 = tpu.matmul %14, %13, %cst_4 {dimension_numbers = #tpu.dot_dimension_numbers<[1], [1], [0], [0], [0, 0, 1, 0], [], []>} : vector<128x256xf32>, vector<256x256xf32>, vector<128x256xf32> -> vector<128x256xf32>
    %c0_5 = arith.constant 0 : index
    %c0_6 = arith.constant 0 : index
    %c0_7 = arith.constant 0 : index
    %16 = vector.load %arg4[%c0_5, %c0_6, %c0_7] : memref<1x128x128xf32, #tpu.memory_space<vmem>>, vector<1x128x128xf32>
    %17 = vector.shape_cast %16 : vector<1x128x128xf32> to vector<128x128xf32>
    %cst_8 = arith.constant dense<0.000000e+00> : vector<128x128xf32>
    %18 = tpu.matmul %15, %15, %cst_8 {dimension_numbers = #tpu.dot_dimension_numbers<[1], [1], [0], [0], [0, 0, 1, 0], [], []>} : vector<128x256xf32>, vector<128x256xf32>, vector<128x128xf32> -> vector<128x128xf32>
    %19 = arith.addf %17, %18 : vector<128x128xf32>
    %c0_9 = arith.constant 0 : index
    %c0_10 = arith.constant 0 : index
    %c0_11 = arith.constant 0 : index
    %20 = vector.load %arg4[%c0_9, %c0_10, %c0_11] : memref<1x128x128xf32, #tpu.memory_space<vmem>>, vector<1x128x128xf32>
    %21 = vector.shape_cast %20 : vector<1x128x128xf32> to vector<128x128xf32>
    %22 = vector.shape_cast %19 : vector<128x128xf32> to vector<1x128x128xf32>
    tpu.vector_store %arg4[%c0_9, %c0_10, %c0_11], %22 {strides = array<i32>} : memref<1x128x128xf32, #tpu.memory_space<vmem>>, vector<1x128x128xf32>,
    return
  }
  func.func @transform_0(%arg0: i32, %arg1: i32) -> (i32, i32) {
    %c0_i32 = arith.constant 0 : i32
    %c0_i32_0 = arith.constant 0 : i32
    %c0_i32_1 = arith.constant 0 : i32
    return %c0_i32, %c0_i32_0 : i32, i32
  }
  func.func @transform_1(%arg0: i32, %arg1: i32) -> (i32, i32) {
    %c2_i32 = arith.constant 2 : i32
    %0 = arith.muli %arg0, %c2_i32 : i32
    %1 = arith.addi %0, %arg1 : i32
    %c3_i32 = arith.constant 3 : i32
    %2 = arith.minsi %1, %c3_i32 : i32
    %c0_i32 = arith.constant 0 : i32
    %c0_i32_0 = arith.constant 0 : i32
    return %2, %c0_i32 : i32, i32
  }
  func.func @transform_2(%arg0: i32, %arg1: i32) -> (i32, i32, i32) {
    %c0_i32 = arith.constant 0 : i32
    %c0_i32_0 = arith.constant 0 : i32
    %c0_i32_1 = arith.constant 0 : i32
    return %arg0, %c0_i32, %c0_i32_0 : i32, i32, i32
  }
}

</mosaic_0001>

<llo_original>
// kernel: tpu_custom_call.1
$region0: #{tpu_custom_call.1}
  #allocation0 [shape = 'u32[]', space=smem, size = 0x4, offset = 0x4, fixed_abs, tag = 'smem constant byte address 0x4 - core index']
  #allocation1 [shape = 'u32[72,128]{1,0:T(1,128)}', space=vmem, size = 0x9000, scoped, tag = 'internal scratch']
  %s0 = inlined_call_operand.hbm [shape: f32[128,256], index: 0, kind: input, shape index: {}]
  %s1 = inlined_call_operand.hbm [shape: f32[1000,256], index: 1, kind: input, shape index: {}]
  %s2 = inlined_call_operand.hbm [shape: f32[2,128,128], index: 2, kind: output, shape index: {}]
  %s3 = sld [smem:[#allocation0]]
  $region53: #{tpu_custom_call.1} parent=0
    _
  %s5 = ssub.s32 1, %s3
  %s6 = scalar_select 0, %s5, %s3
  $region1: #{tpu_custom_call.1} parent=0
    #allocation2 [shape = 'u8[131072]{0}', space=vmem, size = 0x20000, scoped, tag = 'input window, operand 0, single buffered']
    #allocation3 [shape = 's32[2]{0}', space=sflag, size = 0x8, scoped, tag = 'scoped memory for tpu_custom_call.1']
    #allocation4 [shape = 's32[2]{0}', space=sflag, size = 0x8, scoped, tag = 'scoped memory for tpu_custom_call.1']
    #allocation5 [shape = 'u8[524288]{0}', space=vmem, size = 0x80000, scoped, tag = 'input window, operand 1']
    #allocation6 [shape = 's32[2]{0}', space=sflag, size = 0x8, scoped, tag = 'scoped memory for tpu_custom_call.1']
    #allocation7 [shape = 'u8[131072]{0}', space=vmem, size = 0x20000, scoped, tag = 'output window, operand 0']
    %7 = vsyncpa [#allocation3], 0
    %8 = vsyncpa [#allocation6], 0
    %s9 = scalar_lea.sflag [#allocation6], 1
    %10 = vsyncpa %s9, 0
    %11 = vsyncpa [#allocation4], 0
    %s12 = scalar_lea.sflag [#allocation4], 1
    %13 = vsyncpa %s12, 0
    loop: start=0, step=1, limit=6
    $region2: #{tpu_custom_call.1} parent=1 // loop_pre_header
      _
    $region3: #{tpu_custom_call.1} parent=1 // loop_header
      %s15 = sphi 0, %s19
      %p16 = scmp.ge.s32.totalorder %s15, 6
      %s22 = sphi 0, %s34
      %s23 = sphi 0, %s30
      %s24 = sphi 0, %s22
      %s25 = sphi 0, %s23
      %s26 = sphi 0, %s24
      %s27 = sphi 0, %s25
      %s35 = sphi 0, %s35
      %s37 = sphi 0, %s35
      %s38 = sphi 0, %s37
      %s52 = sphi 0, %s38
      %s66 = sphi 0, %s68
      %s69 = sphi 0, %s66
      %s70 = sphi 0, %s69
      %s86 = sphi 0, %s70
      %s92 = sphi 0, %s94
      %s95 = sphi 0, %s92
      %s96 = sphi 0, %s95
      %s112 = sphi 0, %s96
    $region4: #{tpu_custom_call.1} parent=1 // loop_header_branch
      %18 = sbr.rel (%p16) target = $region8
    $region5: #{tpu_custom_call.1} parent=1 // loop_body
      %s20 = ssub.s32 %s15, 1
      %s21 = ssub.s32 %s15, 2
      %s28 = sadd.s32 1, %s23
      %p29 = scmp.ge.s32.totalorder %s28, 2
      %s30 = scalar_select %p29, 0, %s28
      %s31 = sadd.s32 1, %s22
      %s32 = scalar_select %p29, %s31, %s22
      %p33 = scmp.ge.s32.totalorder %s32, 2
      %s34 = scalar_select %p33, 0, %s32
      %s36 = sadd.s32 %s35, 1
      %p39 = scmp.eq.s32.totalorder %s15, 3
      %p40 = scmp.ne.s32.totalorder %s35, %s37
      %p41 = scmp.eq.s32.totalorder %s15, 0
      %p42 = por %p40, %p41
      %p43 = scmp.ne.s32.totalorder %s35, %s37
      %p44 = scmp.eq.s32.totalorder %s20, 3
      %p45 = por %p43, %p44
      %p46 = scmp.ne.s32.totalorder %s37, %s38
      %p47 = scmp.eq.s32.totalorder %s20, 0
      %p48 = por %p46, %p47
      %p49 = scmp.ne.s32.totalorder %s37, %s38
      %p50 = scmp.eq.s32.totalorder %s21, 3
      %p51 = por %p49, %p50
      %p53 = scmp.ne.s32.totalorder %s38, %s52
      %p54 = scmp.eq.s32.totalorder %s21, 0
      %p55 = por %p53, %p54
      %s56 = smul.u32 %s22, 2
      %s57 = sadd.s32 %s56, %s23
      %p58 = scmp.lt.s32.totalorder %s57, 3
      %s59 = scalar_select %p58, %s57, 3
      %s60 = smul.u32 %s34, 2
      %s61 = sadd.s32 %s60, %s30
      %p62 = scmp.lt.s32.totalorder %s61, 3
      %s63 = scalar_select %p62, %s61, 3
      %s64 = ssub.s32 %s59, %s63
      %p65 = scmp.eq.s32.totalorder %s64, 0
      %s67 = sadd.s32 %s66, 1
      %s68 = scalar_select %p65, %s66, %s67
      %p71 = pneg %p65
      %p72 = scmp.eq.s32.totalorder %s15, 3
      %p73 = por %p71, %p72
      %p74 = scmp.ne.s32.totalorder %s66, %s69
      %p75 = scmp.eq.s32.totalorder %s15, 0
      %p76 = por %p74, %p75
      %p77 = scmp.ne.s32.totalorder %s66, %s69
      %p78 = scmp.eq.s32.totalorder %s20, 3
      %p79 = por %p77, %p78
      %p80 = scmp.ne.s32.totalorder %s69, %s70
      %p81 = scmp.eq.s32.totalorder %s20, 0
      %p82 = por %p80, %p81
      %p83 = scmp.ne.s32.totalorder %s69, %s70
      %p84 = scmp.eq.s32.totalorder %s21, 3
      %p85 = por %p83, %p84
      %p87 = scmp.ne.s32.totalorder %s70, %s86
      %p88 = scmp.eq.s32.totalorder %s21, 0
      %p89 = por %p87, %p88
      %s90 = ssub.s32 %s22, %s34
      %p91 = scmp.eq.s32.totalorder %s90, 0
      %s93 = sadd.s32 %s92, 1
      %s94 = scalar_select %p91, %s92, %s93
      %p97 = pneg %p91
      %p98 = scmp.eq.s32.totalorder %s15, 3
      %p99 = por %p97, %p98
      %p100 = scmp.ne.s32.totalorder %s92, %s95
      %p101 = scmp.eq.s32.totalorder %s15, 0
      %p102 = por %p100, %p101
      %p103 = scmp.ne.s32.totalorder %s92, %s95
      %p104 = scmp.eq.s32.totalorder %s20, 3
      %p105 = por %p103, %p104
      %p106 = scmp.ne.s32.totalorder %s95, %s96
      %p107 = scmp.eq.s32.totalorder %s20, 0
      %p108 = por %p106, %p107
      %p109 = scmp.ne.s32.totalorder %s95, %s96
      %p110 = scmp.eq.s32.totalorder %s21, 3
      %p111 = por %p109, %p110
      %p113 = scmp.ne.s32.totalorder %s96, %s112
      %p114 = scmp.eq.s32.totalorder %s21, 0
      %p115 = por %p113, %p114
      %p116 = scmp.le.s32.totalorder 1, %s15
      %p117 = scmp.lt.s32.totalorder %s15, 5
      %p118 = pnand %p116, %p117
      %p119 = pneg %p118
      // Predicated region
      $region9: #{tpu_custom_call.1} parent=5 // pred_check
        _
      $region10: #{tpu_custom_call.1} parent=5 // pred_check_branch
        %121 = sbr.rel (%p118) target = $region12
      $region11: #{tpu_custom_call.1} parent=5 // pred_region
        %s122 = ssub.s32 %s15, 1
        // Predicated region
        $region13: #{tpu_custom_call.1} parent=11 // pred_check
          %p123 = pneg %p48
        $region14: #{tpu_custom_call.1} parent=11 // pred_check_branch
          %125 = sbr.rel (%p123) target = $region16
        $region15: #{tpu_custom_call.1} parent=11 // pred_region
          %127 = vsyncadd [#allocation3], 0
          %s128 = sshll.u32 %s0, 4
          %s129 = int_to_ptr.hbm [resolvable:$true] %s128
          %s130 = sshll.u32 [#allocation2], 4
          %s131 = int_to_ptr.vmem [resolvable:$true] %s130
          %136 = dma.hbm_to_vmem [thread:$0]  %s129, 4096, %s131, [#allocation3], 256, 256, 16
        $region16: #{tpu_custom_call.1} parent=11 // pred_fallthru
          _
      $region12: #{tpu_custom_call.1} parent=5 // pred_fallthru
        _
      %p137 = scmp.lt.s32.totalorder %s15, 4
      // Predicated region
      $region17: #{tpu_custom_call.1} parent=5 // pred_check
        %p138 = pneg %p137
      $region18: #{tpu_custom_call.1} parent=5 // pred_check_branch
        %140 = sbr.rel (%p138) target = $region20
      $region19: #{tpu_custom_call.1} parent=5 // pred_region
        // Predicated region
        $region21: #{tpu_custom_call.1} parent=19 // pred_check
          %p141 = pneg %p76
        $region22: #{tpu_custom_call.1} parent=19 // pred_check_branch
          %143 = sbr.rel (%p141) target = $region24
        $region23: #{tpu_custom_call.1} parent=19 // pred_region
          %s144 = sand.u32 %s66, 1
          %s145 = scalar_lea.sflag [#allocation6], %s144
          %s146 = sand.u32 %s66, 1
          %s147 = smul.addr %s146, 512
          %s148 = scalar_lea.vmem [#allocation5], %s147
          %s149 = smul.u32 %s22, 2
          %s150 = sadd.s32 %s149, %s23
          %p151 = scmp.lt.s32.totalorder %s150, 3
          %s152 = scalar_select %p151, %s150, 3
          %s153 = smul.u32 32, %s152
          %s154 = ssub.s32 125, %s153
          %p155 = scmp.lt.s32.totalorder %s154, 32
          %s156 = scalar_select %p155, %s154, 32
          %s157 = smul.u32 8, %s156
          %s158 = smul.u32 %s157, 2
          %s159 = ssub.s32 512, %s158
          %s160 = sshll.u32 %s159, 4
          %161 = vsyncadd %s145, %s160
          %p162 = scmp.ne.s32.totalorder 0, %s158
          %s163 = smul.addr %s153, 2
          %s164 = smul.addr %s163, 8
          %s165 = scalar_lea.hbm %s1, %s164
          %s166 = smul.u32 16, %s156
          %s167 = sshll.u32 %s165, 4
          %s168 = int_to_ptr.hbm [resolvable:$true] %s167
          %s169 = sshll.u32 %s148, 4
          %s170 = int_to_ptr.vmem [resolvable:$true] %s169
          %s171 = sshll.u32 %s166, 4
          %175 = dma.hbm_to_vmem [thread:$0]  (%p162), %s168, %s171, %s170, %s145, 256, 256, 16
        $region24: #{tpu_custom_call.1} parent=19 // pred_fallthru
          _
      $region20: #{tpu_custom_call.1} parent=5 // pred_fallthru
        _
      %p176 = scmp.le.s32.totalorder 1, %s15
      %p177 = scmp.lt.s32.totalorder %s15, 5
      %p178 = pnand %p176, %p177
      %p179 = pneg %p178
      // Predicated region
      $region25: #{tpu_custom_call.1} parent=5 // pred_check
        _
      $region26: #{tpu_custom_call.1} parent=5 // pred_check_branch
        %181 = sbr.rel (%p178) target = $region28
      $region27: #{tpu_custom_call.1} parent=5 // pred_region
        %s182 = ssub.s32 %s15, 1
        // Predicated region
        $region29: #{tpu_custom_call.1} parent=27 // pred_check
          %p183 = pneg %p48
        $region30: #{tpu_custom_call.1} parent=27 // pred_check_branch
          %185 = sbr.rel (%p183) target = $region32
        $region31: #{tpu_custom_call.1} parent=27 // pred_region
          %187 = dma.done [#allocation3], 4096
        $region32: #{tpu_custom_call.1} parent=27 // pred_fallthru
          _
        %s188 = sand.u32 %s69, 1
        %s189 = scalar_lea.sflag [#allocation6], %s188
        %s190 = sand.u32 %s69, 1
        %s191 = smul.addr %s190, 512
        %s192 = scalar_lea.vmem [#allocation5], %s191
        // Predicated region
        $region33: #{tpu_custom_call.1} parent=27 // pred_check
          %p193 = pneg %p82
        $region34: #{tpu_custom_call.1} parent=27 // pred_check_branch
          %195 = sbr.rel (%p193) target = $region36
        $region35: #{tpu_custom_call.1} parent=27 // pred_region
          %197 = dma.done %s189, 8192
        $region36: #{tpu_custom_call.1} parent=27 // pred_fallthru
          _
        %p198 = pneg %p48
        %p199 = pneg %p45
        %s200 = sand.u32 %s69, 1
        %s201 = scalar_lea.sflag [#allocation6], %s200
        %s202 = sand.u32 %s69, 1
        %s203 = smul.addr %s202, 512
        %s204 = scalar_lea.vmem [#allocation5], %s203
        %p205 = pneg %p82
        %p206 = pneg %p79
        %p207 = pneg %p108
        %p208 = pneg %p105
        %s209 = sand.u32 %s95, 1
        %s210 = scalar_lea.sflag [#allocation4], %s209
        %s211 = sand.u32 %s95, 1
        %s212 = smul.addr %s211, 128
        %s213 = scalar_lea.vmem [#allocation7], %s212
        %s214 = smul.u32 %s24, 2
        %s215 = sadd.s32 %s214, %s25
        %p216 = scmp.lt.s32.totalorder %s215, 3
        %s217 = scalar_select %p216, %s215, 3
        %s218 = smul.u32 32, %s217
        %s219 = ssub.s32 125, %s218
        %p220 = scmp.lt.s32.totalorder %s219, 32
        %s221 = scalar_select %p220, %s219, 32
        %s222 = smul.u32 8, %s221
        %s223 = smul.u32 %s222, 2
        %p224 = scmp.eq.s32.totalorder %s25, 0
        // Predicated region
        $region37: #{tpu_custom_call.1} parent=27 // pred_check
          %p225 = pneg %p224
        $region38: #{tpu_custom_call.1} parent=27 // pred_check_branch
          %227 = sbr.rel (%p225) target = $region40
        $region39: #{tpu_custom_call.1} parent=27 // pred_region
          %228 = vst [vmem:[%s213] sm:$0xff] 0.0
          %229 = vst [vmem:[%s213 + $0x8] sm:$0xff] 0.0
          %230 = vst [vmem:[%s213 + $0x10] sm:$0xff] 0.0
          %231 = vst [vmem:[%s213 + $0x18] sm:$0xff] 0.0
          %232 = vst [vmem:[%s213 + $0x20] sm:$0xff] 0.0
          %233 = vst [vmem:[%s213 + $0x28] sm:$0xff] 0.0
          %234 = vst [vmem:[%s213 + $0x30] sm:$0xff] 0.0
          %235 = vst [vmem:[%s213 + $0x38] sm:$0xff] 0.0
          %236 = vst [vmem:[%s213 + $0x40] sm:$0xff] 0.0
          %237 = vst [vmem:[%s213 + $0x48] sm:$0xff] 0.0
          %238 = vst [vmem:[%s213 + $0x50] sm:$0xff] 0.0
          %239 = vst [vmem:[%s213 + $0x58] sm:$0xff] 0.0
          %240 = vst [vmem:[%s213 + $0x60] sm:$0xff] 0.0
          %241 = vst [vmem:[%s213 + $0x68] sm:$0xff] 0.0
          %242 = vst [vmem:[%s213 + $0x70] sm:$0xff] 0.0
          %243 = vst [vmem:[%s213 + $0x78] sm:$0xff] 0.0
        $region40: #{tpu_custom_call.1} parent=27 // pred_fallthru
          _
        %v244 = vld [vmem:[%s192] sm:$0xff]
        %v245 = vld [vmem:[%s192 + $0x8] sm:$0xff]
        %v246 = vld [vmem:[%s192 + $0x10] sm:$0xff]
        %v247 = vld [vmem:[%s192 + $0x18] sm:$0xff]
        %v248 = vld [vmem:[%s192 + $0x20] sm:$0xff]
        %v249 = vld [vmem:[%s192 + $0x28] sm:$0xff]
        %v250 = vld [vmem:[%s192 + $0x30] sm:$0xff]
        %v251 = vld [vmem:[%s192 + $0x38] sm:$0xff]
        %v252 = vld [vmem:[%s192 + $0x40] sm:$0xff]
        %v253 = vld [vmem:[%s192 + $0x48] sm:$0xff]
        %v254 = vld [vmem:[%s192 + $0x50] sm:$0xff]
        %v255 = vld [vmem:[%s192 + $0x58] sm:$0xff]
        %v256 = vld [vmem:[%s192 + $0x60] sm:$0xff]
        %v257 = vld [vmem:[%s192 + $0x68] sm:$0xff]
        %v258 = vld [vmem:[%s192 + $0x70] sm:$0xff]
        %v259 = vld [vmem:[%s192 + $0x78] sm:$0xff]
        %v260 = vld [vmem:[%s192 + $0x80] sm:$0xff]
        %v261 = vld [vmem:[%s192 + $0x88] sm:$0xff]
        %v262 = vld [vmem:[%s192 + $0x90] sm:$0xff]
        %v263 = vld [vmem:[%s192 + $0x98] sm:$0xff]
        %v264 = vld [vmem:[%s192 + $0xa0] sm:$0xff]
        %v265 = vld [vmem:[%s192 + $0xa8] sm:$0xff]
        %v266 = vld [vmem:[%s192 + $0xb0] sm:$0xff]
        %v267 = vld [vmem:[%s192 + $0xb8] sm:$0xff]
        %v268 = vld [vmem:[%s192 + $0xc0] sm:$0xff]
        %v269 = vld [vmem:[%s192 + $0xc8] sm:$0xff]
        %v270 = vld [vmem:[%s192 + $0xd0] sm:$0xff]
        %v271 = vld [vmem:[%s192 + $0xd8] sm:$0xff]
        %v272 = vld [vmem:[%s192 + $0xe0] sm:$0xff]
        %v273 = vld [vmem:[%s192 + $0xe8] sm:$0xff]
        %v274 = vld [vmem:[%s192 + $0xf0] sm:$0xff]
        %v275 = vld [vmem:[%s192 + $0xf8] sm:$0xff]
        %v276 = vld [vmem:[%s192 + $0x100] sm:$0xff]
        %v277 = vld [vmem:[%s192 + $0x108] sm:$0xff]
        %v278 = vld [vmem:[%s192 + $0x110] sm:$0xff]
        %v279 = vld [vmem:[%s192 + $0x118] sm:$0xff]
        %v280 = vld [vmem:[%s192 + $0x120] sm:$0xff]
        %v281 = vld [vmem:[%s192 + $0x128] sm:$0xff]
        %v282 = vld [vmem:[%s192 + $0x130] sm:$0xff]
        %v283 = vld [vmem:[%s192 + $0x138] sm:$0xff]
        %v284 = vld [vmem:[%s192 + $0x140] sm:$0xff]
        %v285 = vld [vmem:[%s192 + $0x148] sm:$0xff]
        %v286 = vld [vmem:[%s192 + $0x150] sm:$0xff]
        %v287 = vld [vmem:[%s192 + $0x158] sm:$0xff]
        %v288 = vld [vmem:[%s192 + $0x160] sm:$0xff]
        %v289 = vld [vmem:[%s192 + $0x168] sm:$0xff]
        %v290 = vld [vmem:[%s192 + $0x170] sm:$0xff]
        %v291 = vld [vmem:[%s192 + $0x178] sm:$0xff]
        %v292 = vld [vmem:[%s192 + $0x180] sm:$0xff]
        %v293 = vld [vmem:[%s192 + $0x188] sm:$0xff]
        %v294 = vld [vmem:[%s192 + $0x190] sm:$0xff]
        %v295 = vld [vmem:[%s192 + $0x198] sm:$0xff]
        %v296 = vld [vmem:[%s192 + $0x1a0] sm:$0xff]
        %v297 = vld [vmem:[%s192 + $0x1a8] sm:$0xff]
        %v298 = vld [vmem:[%s192 + $0x1b0] sm:$0xff]
        %v299 = vld [vmem:[%s192 + $0x1b8] sm:$0xff]
        %v300 = vld [vmem:[%s192 + $0x1c0] sm:$0xff]
        %v301 = vld [vmem:[%s192 + $0x1c8] sm:$0xff]
        %v302 = vld [vmem:[%s192 + $0x1d0] sm:$0xff]
        %v303 = vld [vmem:[%s192 + $0x1d8] sm:$0xff]
        %v304 = vld [vmem:[%s192 + $0x1e0] sm:$0xff]
        %v305 = vld [vmem:[%s192 + $0x1e8] sm:$0xff]
        %v306 = vld [vmem:[%s192 + $0x1f0] sm:$0xff]
        %v307 = vld [vmem:[%s192 + $0x1f8] sm:$0xff]
        %s308 = smul.u32 %s24, 2
        %s309 = sadd.s32 %s308, %s25
        %s310 = smul.u32 %s309, 256
        %v311 = vlaneseq
        %v312 = vshrl.u32 %v311, 7
        %v313 = vadd.s32 %v312, 8
        %v314 = vadd.s32 %v312, 16
        %v315 = vadd.s32 %v312, 24
        %v316 = vadd.s32 %v312, 32
        %v317 = vadd.s32 %v312, 40
        %v318 = vadd.s32 %v312, 48
        %v319 = vadd.s32 %v312, 56
        %v320 = vadd.s32 %v312, 64
        %v321 = vadd.s32 %v312, 72
        %v322 = vadd.s32 %v312, 80
        %v323 = vadd.s32 %v312, 88
        %v324 = vadd.s32 %v312, 96
        %v325 = vadd.s32 %v312, 104
        %v326 = vadd.s32 %v312, 112
        %v327 = vadd.s32 %v312, 120
        %v328 = vadd.s32 %v312, 128
        %v329 = vadd.s32 %v312, 136
        %v330 = vadd.s32 %v312, 144
        %v331 = vadd.s32 %v312, 152
        %v332 = vadd.s32 %v312, 160
        %v333 = vadd.s32 %v312, 168
        %v334 = vadd.s32 %v312, 176
        %v335 = vadd.s32 %v312, 184
        %v336 = vadd.s32 %v312, 192
        %v337 = vadd.s32 %v312, 200
        %v338 = vadd.s32 %v312, 208
        %v339 = vadd.s32 %v312, 216
        %v340 = vadd.s32 %v312, 224
        %v341 = vadd.s32 %v312, 232
        %v342 = vadd.s32 %v312, 240
        %v343 = vadd.s32 %v312, 248
        %v344 = vstv %s310
        %v345 = vadd.s32 %v344, %v312
        %v346 = vadd.s32 %v344, %v313
        %v347 = vadd.s32 %v344, %v314
        %v348 = vadd.s32 %v344, %v315
        %v349 = vadd.s32 %v344, %v316
        %v350 = vadd.s32 %v344, %v317
        %v351 = vadd.s32 %v344, %v318
        %v352 = vadd.s32 %v344, %v319
        %v353 = vadd.s32 %v344, %v320
        %v354 = vadd.s32 %v344, %v321
        %v355 = vadd.s32 %v344, %v322
        %v356 = vadd.s32 %v344, %v323
        %v357 = vadd.s32 %v344, %v324
        %v358 = vadd.s32 %v344, %v325
        %v359 = vadd.s32 %v344, %v326
        %v360 = vadd.s32 %v344, %v327
        %v361 = vadd.s32 %v344, %v328
        %v362 = vadd.s32 %v344, %v329
        %v363 = vadd.s32 %v344, %v330
        %v364 = vadd.s32 %v344, %v331
        %v365 = vadd.s32 %v344, %v332
        %v366 = vadd.s32 %v344, %v333
        %v367 = vadd.s32 %v344, %v334
        %v368 = vadd.s32 %v344, %v335
        %v369 = vadd.s32 %v344, %v336
        %v370 = vadd.s32 %v344, %v337
        %v371 = vadd.s32 %v344, %v338
        %v372 = vadd.s32 %v344, %v339
        %v373 = vadd.s32 %v344, %v340
        %v374 = vadd.s32 %v344, %v341
        %v375 = vadd.s32 %v344, %v342
        %v376 = vadd.s32 %v344, %v343
        %vm377 = vcmp.lt.s32.totalorder %v345, 1000
        %vm378 = vcmp.lt.s32.totalorder %v346, 1000
        %vm379 = vcmp.lt.s32.totalorder %v347, 1000
        %vm380 = vcmp.lt.s32.totalorder %v348, 1000
        %vm381 = vcmp.lt.s32.totalorder %v349, 1000
        %vm382 = vcmp.lt.s32.totalorder %v350, 1000
        %vm383 = vcmp.lt.s32.totalorder %v351, 1000
        %vm384 = vcmp.lt.s32.totalorder %v352, 1000
        %vm385 = vcmp.lt.s32.totalorder %v353, 1000
        %vm386 = vcmp.lt.s32.totalorder %v354, 1000
        %vm387 = vcmp.lt.s32.totalorder %v355, 1000
        %vm388 = vcmp.lt.s32.totalorder %v356, 1000
        %vm389 = vcmp.lt.s32.totalorder %v357, 1000
        %vm390 = vcmp.lt.s32.totalorder %v358, 1000
        %vm391 = vcmp.lt.s32.totalorder %v359, 1000
        %vm392 = vcmp.lt.s32.totalorder %v360, 1000
        %vm393 = vcmp.lt.s32.totalorder %v361, 1000
        %vm394 = vcmp.lt.s32.totalorder %v362, 1000
        %vm395 = vcmp.lt.s32.totalorder %v363, 1000
        %vm396 = vcmp.lt.s32.totalorder %v364, 1000
        %vm397 = vcmp.lt.s32.totalorder %v365, 1000
        %vm398 = vcmp.lt.s32.totalorder %v366, 1000
        %vm399 = vcmp.lt.s32.totalorder %v367, 1000
        %vm400 = vcmp.lt.s32.totalorder %v368, 1000
        %vm401 = vcmp.lt.s32.totalorder %v369, 1000
        %vm402 = vcmp.lt.s32.totalorder %v370, 1000
        %vm403 = vcmp.lt.s32.totalorder %v371, 1000
        %vm404 = vcmp.lt.s32.totalorder %v372, 1000
        %vm405 = vcmp.lt.s32.totalorder %v373, 1000
        %vm406 = vcmp.lt.s32.totalorder %v374, 1000
        %vm407 = vcmp.lt.s32.totalorder %v375, 1000
        %vm408 = vcmp.lt.s32.totalorder %v376, 1000
        %v409 = vsel %vm377, %v244, 0.0
        %v410 = vsel %vm377, %v245, 0.0
        %v411 = vsel %vm378, %v246, 0.0
        %v412 = vsel %vm378, %v247, 0.0
        %v413 = vsel %vm379, %v248, 0.0
        %v414 = vsel %vm379, %v249, 0.0
        %v415 = vsel %vm380, %v250, 0.0
        %v416 = vsel %vm380, %v251, 0.0
        %v417 = vsel %vm381, %v252, 0.0
        %v418 = vsel %vm381, %v253, 0.0
        %v419 = vsel %vm382, %v254, 0.0
        %v420 = vsel %vm382, %v255, 0.0
        %v421 = vsel %vm383, %v256, 0.0
        %v422 = vsel %vm383, %v257, 0.0
        %v423 = vsel %vm384, %v258, 0.0
        %v424 = vsel %vm384, %v259, 0.0
        %v425 = vsel %vm385, %v260, 0.0
        %v426 = vsel %vm385, %v261, 0.0
        %v427 = vsel %vm386, %v262, 0.0
        %v428 = vsel %vm386, %v263, 0.0
        %v429 = vsel %vm387, %v264, 0.0
        %v430 = vsel %vm387, %v265, 0.0
        %v431 = vsel %vm388, %v266, 0.0
        %v432 = vsel %vm388, %v267, 0.0
        %v433 = vsel %vm389, %v268, 0.0
        %v434 = vsel %vm389, %v269, 0.0
        %v435 = vsel %vm390, %v270, 0.0
        %v436 = vsel %vm390, %v271, 0.0
        %v437 = vsel %vm391, %v272, 0.0
        %v438 = vsel %vm391, %v273, 0.0
        %v439 = vsel %vm392, %v274, 0.0
        %v440 = vsel %vm392, %v275, 0.0
        %v441 = vsel %vm393, %v276, 0.0
        %v442 = vsel %vm393, %v277, 0.0
        %v443 = vsel %vm394, %v278, 0.0
        %v444 = vsel %vm394, %v279, 0.0
        %v445 = vsel %vm395, %v280, 0.0
        %v446 = vsel %vm395, %v281, 0.0
        %v447 = vsel %vm396, %v282, 0.0
        %v448 = vsel %vm396, %v283, 0.0
        %v449 = vsel %vm397, %v284, 0.0
        %v450 = vsel %vm397, %v285, 0.0
        %v451 = vsel %vm398, %v286, 0.0
        %v452 = vsel %vm398, %v287, 0.0
        %v453 = vsel %vm399, %v288, 0.0
        %v454 = vsel %vm399, %v289, 0.0
        %v455 = vsel %vm400, %v290, 0.0
        %v456 = vsel %vm400, %v291, 0.0
        %v457 = vsel %vm401, %v292, 0.0
        %v458 = vsel %vm401, %v293, 0.0
        %v459 = vsel %vm402, %v294, 0.0
        %v460 = vsel %vm402, %v295, 0.0
        %v461 = vsel %vm403, %v296, 0.0
        %v462 = vsel %vm403, %v297, 0.0
        %v463 = vsel %vm404, %v298, 0.0
        %v464 = vsel %vm404, %v299, 0.0
        %v465 = vsel %vm405, %v300, 0.0
        %v466 = vsel %vm405, %v301, 0.0
        %v467 = vsel %vm406, %v302, 0.0
        %v468 = vsel %vm406, %v303, 0.0
        %v469 = vsel %vm407, %v304, 0.0
        %v470 = vsel %vm407, %v305, 0.0
        %v471 = vsel %vm408, %v306, 0.0
        %v472 = vsel %vm408, %v307, 0.0
        %v473 = vld [vmem:[#allocation2] sm:$0xff]
        %v474 = vld [vmem:[#allocation2 + $0x8] sm:$0xff]
        %v475 = vld [vmem:[#allocation2 + $0x10] sm:$0xff]
        %v476 = vld [vmem:[#allocation2 + $0x18] sm:$0xff]
        %v477 = vld [vmem:[#allocation2 + $0x20] sm:$0xff]
        %v478 = vld [vmem:[#allocation2 + $0x28] sm:$0xff]
        %v479 = vld [vmem:[#allocation2 + $0x30] sm:$0xff]
        %v480 = vld [vmem:[#allocation2 + $0x38] sm:$0xff]
        %v481 = vld [vmem:[#allocation2 + $0x40] sm:$0xff]
        %v482 = vld [vmem:[#allocation2 + $0x48] sm:$0xff]
        %v483 = vld [vmem:[#allocation2 + $0x50] sm:$0xff]
        %v484 = vld [vmem:[#allocation2 + $0x58] sm:$0xff]
        %v485 = vld [vmem:[#allocation2 + $0x60] sm:$0xff]
        %v486 = vld [vmem:[#allocation2 + $0x68] sm:$0xff]
        %v487 = vld [vmem:[#allocation2 + $0x70] sm:$0xff]
        %v488 = vld [vmem:[#allocation2 + $0x78] sm:$0xff]
        %v489 = vld [vmem:[#allocation2 + $0x80] sm:$0xff]
        %v490 = vld [vmem:[#allocation2 + $0x88] sm:$0xff]
        %v491 = vld [vmem:[#allocation2 + $0x90] sm:$0xff]
        %v492 = vld [vmem:[#allocation2 + $0x98] sm:$0xff]
        %v493 = vld [vmem:[#allocation2 + $0xa0] sm:$0xff]
        %v494 = vld [vmem:[#allocation2 + $0xa8] sm:$0xff]
        %v495 = vld [vmem:[#allocation2 + $0xb0] sm:$0xff]
        %v496 = vld [vmem:[#allocation2 + $0xb8] sm:$0xff]
        %v497 = vld [vmem:[#allocation2 + $0xc0] sm:$0xff]
        %v498 = vld [vmem:[#allocation2 + $0xc8] sm:$0xff]
        %v499 = vld [vmem:[#allocation2 + $0xd0] sm:$0xff]
        %v500 = vld [vmem:[#allocation2 + $0xd8] sm:$0xff]
        %v501 = vld [vmem:[#allocation2 + $0xe0] sm:$0xff]
        %v502 = vld [vmem:[#allocation2 + $0xe8] sm:$0xff]
        %v503 = vld [vmem:[#allocation2 + $0xf0] sm:$0xff]
        %v504 = vld [vmem:[#allocation2 + $0xf8] sm:$0xff]
        %505 = vmatpush.xpose.msra.mxu0 %v439
        %506 = vmatpush.xpose.msra.mxu0 %v437
        %507 = vmatpush.xpose.msra.mxu0 %v435
        %508 = vmatpush.xpose.msra.mxu0 %v433
        %509 = vmatpush.xpose.msra.mxu0 %v431
        %510 = vmatpush.xpose.msra.mxu0 %v429
        %511 = vmatpush.xpose.msra.mxu0 %v427
        %512 = vmatpush.xpose.msra.mxu0 %v425
        %513 = vmatpush.xpose.msra.mxu0 %v423
        %514 = vmatpush.xpose.msra.mxu0 %v421
        %515 = vmatpush.xpose.msra.mxu0 %v419
        %516 = vmatpush.xpose.msra.mxu0 %v417
        %517 = vmatpush.xpose.msra.mxu0 %v415
        %518 = vmatpush.xpose.msra.mxu0 %v413
        %519 = vmatpush.xpose.msra.mxu0 %v411
        %520 = vmatpush.xpose.msra.mxu0 %v409
        %521 = vmatmul.f32.gmra.mxu0 %v473
        %v522 = vpop.f32.mrf.mxu0
        %v523 = vadd.f32 0.0, %v522
        %524 = vmatmul.f32.gmra.mxu0 %v475
        %v525 = vpop.f32.mrf.mxu0
        %v526 = vadd.f32 0.0, %v525
        %527 = vmatmul.f32.gmra.mxu0 %v477
        %v528 = vpop.f32.mrf.mxu0
        %v529 = vadd.f32 0.0, %v528
        %530 = vmatmul.f32.gmra.mxu0 %v479
        %v531 = vpop.f32.mrf.mxu0
        %v532 = vadd.f32 0.0, %v531
        %533 = vmatmul.f32.gmra.mxu0 %v481
        %v534 = vpop.f32.mrf.mxu0
        %v535 = vadd.f32 0.0, %v534
        %536 = vmatmul.f32.gmra.mxu0 %v483
        %v537 = vpop.f32.mrf.mxu0
        %v538 = vadd.f32 0.0, %v537
        %539 = vmatmul.f32.gmra.mxu0 %v485
        %v540 = vpop.f32.mrf.mxu0
        %v541 = vadd.f32 0.0, %v540
        %542 = vmatmul.f32.gmra.mxu0 %v487
        %v543 = vpop.f32.mrf.mxu0
        %v544 = vadd.f32 0.0, %v543
        %545 = vmatmul.f32.gmra.mxu0 %v489
        %v546 = vpop.f32.mrf.mxu0
        %v547 = vadd.f32 0.0, %v546
        %548 = vmatmul.f32.gmra.mxu0 %v491
        %v549 = vpop.f32.mrf.mxu0
        %v550 = vadd.f32 0.0, %v549
        %551 = vmatmul.f32.gmra.mxu0 %v493
        %v552 = vpop.f32.mrf.mxu0
        %v553 = vadd.f32 0.0, %v552
        %554 = vmatmul.f32.gmra.mxu0 %v495
        %v555 = vpop.f32.mrf.mxu0
        %v556 = vadd.f32 0.0, %v555
        %557 = vmatmul.f32.gmra.mxu0 %v497
        %v558 = vpop.f32.mrf.mxu0
        %v559 = vadd.f32 0.0, %v558
        %560 = vmatmul.f32.gmra.mxu0 %v499
        %v561 = vpop.f32.mrf.mxu0
        %v562 = vadd.f32 0.0, %v561
        %563 = vmatmul.f32.gmra.mxu0 %v501
        %v564 = vpop.f32.mrf.mxu0
        %v565 = vadd.f32 0.0, %v564
        %566 = vmatmul.f32.gmra.mxu0 %v503
        %v567 = vpop.f32.mrf.mxu0
        %v568 = vadd.f32 0.0, %v567
        %569 = vdwg.mxu0
        %570 = vmatpush.xpose.msra.mxu0 %v440
        %571 = vmatpush.xpose.msra.mxu0 %v438
        %572 = vmatpush.xpose.msra.mxu0 %v436
        %573 = vmatpush.xpose.msra.mxu0 %v434
        %574 = vmatpush.xpose.msra.mxu0 %v432
        %575 = vmatpush.xpose.msra.mxu0 %v430
        %576 = vmatpush.xpose.msra.mxu0 %v428
        %577 = vmatpush.xpose.msra.mxu0 %v426
        %578 = vmatpush.xpose.msra.mxu0 %v424
        %579 = vmatpush.xpose.msra.mxu0 %v422
        %580 = vmatpush.xpose.msra.mxu0 %v420
        %581 = vmatpush.xpose.msra.mxu0 %v418
        %582 = vmatpush.xpose.msra.mxu0 %v416
        %583 = vmatpush.xpose.msra.mxu0 %v414
        %584 = vmatpush.xpose.msra.mxu0 %v412
        %585 = vmatpush.xpose.msra.mxu0 %v410
        %586 = vmatmul.f32.gmra.mxu0 %v474
        %v587 = vpop.f32.mrf.mxu0
        %v588 = vadd.f32 %v523, %v587
        %589 = vmatmul.f32.gmra.mxu0 %v476
        %v590 = vpop.f32.mrf.mxu0
        %v591 = vadd.f32 %v526, %v590
        %592 = vmatmul.f32.gmra.mxu0 %v478
        %v593 = vpop.f32.mrf.mxu0
        %v594 = vadd.f32 %v529, %v593
        %595 = vmatmul.f32.gmra.mxu0 %v480
        %v596 = vpop.f32.mrf.mxu0
        %v597 = vadd.f32 %v532, %v596
        %598 = vmatmul.f32.gmra.mxu0 %v482
        %v599 = vpop.f32.mrf.mxu0
        %v600 = vadd.f32 %v535, %v599
        %601 = vmatmul.f32.gmra.mxu0 %v484
        %v602 = vpop.f32.mrf.mxu0
        %v603 = vadd.f32 %v538, %v602
        %604 = vmatmul.f32.gmra.mxu0 %v486
        %v605 = vpop.f32.mrf.mxu0
        %v606 = vadd.f32 %v541, %v605
        %607 = vmatmul.f32.gmra.mxu0 %v488
        %v608 = vpop.f32.mrf.mxu0
        %v609 = vadd.f32 %v544, %v608
        %610 = vmatmul.f32.gmra.mxu0 %v490
        %v611 = vpop.f32.mrf.mxu0
        %v612 = vadd.f32 %v547, %v611
        %613 = vmatmul.f32.gmra.mxu0 %v492
        %v614 = vpop.f32.mrf.mxu0
        %v615 = vadd.f32 %v550, %v614
        %616 = vmatmul.f32.gmra.mxu0 %v494
        %v617 = vpop.f32.mrf.mxu0
        %v618 = vadd.f32 %v553, %v617
        %619 = vmatmul.f32.gmra.mxu0 %v496
        %v620 = vpop.f32.mrf.mxu0
        %v621 = vadd.f32 %v556, %v620
        %622 = vmatmul.f32.gmra.mxu0 %v498
        %v623 = vpop.f32.mrf.mxu0
        %v624 = vadd.f32 %v559, %v623
        %625 = vmatmul.f32.gmra.mxu0 %v500
        %v626 = vpop.f32.mrf.mxu0
        %v627 = vadd.f32 %v562, %v626
        %628 = vmatmul.f32.gmra.mxu0 %v502
        %v629 = vpop.f32.mrf.mxu0
        %v630 = vadd.f32 %v565, %v629
        %631 = vmatmul.f32.gmra.mxu0 %v504
        %v632 = vpop.f32.mrf.mxu0
        %v633 = vadd.f32 %v568, %v632
        %634 = vdwg.mxu0
        %635 = vmatpush.xpose.msra.mxu0 %v471
        %636 = vmatpush.xpose.msra.mxu0 %v469
        %637 = vmatpush.xpose.msra.mxu0 %v467
        %638 = vmatpush.xpose.msra.mxu0 %v465
        %639 = vmatpush.xpose.msra.mxu0 %v463
        %640 = vmatpush.xpose.msra.mxu0 %v461
        %641 = vmatpush.xpose.msra.mxu0 %v459
        %642 = vmatpush.xpose.msra.mxu0 %v457
        %643 = vmatpush.xpose.msra.mxu0 %v455
        %644 = vmatpush.xpose.msra.mxu0 %v453
        %645 = vmatpush.xpose.msra.mxu0 %v451
        %646 = vmatpush.xpose.msra.mxu0 %v449
        %647 = vmatpush.xpose.msra.mxu0 %v447
        %648 = vmatpush.xpose.msra.mxu0 %v445
        %649 = vmatpush.xpose.msra.mxu0 %v443
        %650 = vmatpush.xpose.msra.mxu0 %v441
        %651 = vmatmul.f32.gmra.mxu0 %v473
        %v652 = vpop.f32.mrf.mxu0
        %v653 = vadd.f32 0.0, %v652
        %654 = vmatmul.f32.gmra.mxu0 %v475
        %v655 = vpop.f32.mrf.mxu0
        %v656 = vadd.f32 0.0, %v655
        %657 = vmatmul.f32.gmra.mxu0 %v477
        %v658 = vpop.f32.mrf.mxu0
        %v659 = vadd.f32 0.0, %v658
        %660 = vmatmul.f32.gmra.mxu0 %v479
        %v661 = vpop.f32.mrf.mxu0
        %v662 = vadd.f32 0.0, %v661
        %663 = vmatmul.f32.gmra.mxu0 %v481
        %v664 = vpop.f32.mrf.mxu0
        %v665 = vadd.f32 0.0, %v664
        %666 = vmatmul.f32.gmra.mxu0 %v483
        %v667 = vpop.f32.mrf.mxu0
        %v668 = vadd.f32 0.0, %v667
        %669 = vmatmul.f32.gmra.mxu0 %v485
        %v670 = vpop.f32.mrf.mxu0
        %v671 = vadd.f32 0.0, %v670
        %672 = vmatmul.f32.gmra.mxu0 %v487
        %v673 = vpop.f32.mrf.mxu0
        %v674 = vadd.f32 0.0, %v673
        %675 = vmatmul.f32.gmra.mxu0 %v489
        %v676 = vpop.f32.mrf.mxu0
        %v677 = vadd.f32 0.0, %v676
        %678 = vmatmul.f32.gmra.mxu0 %v491
        %v679 = vpop.f32.mrf.mxu0
        %v680 = vadd.f32 0.0, %v679
        %681 = vmatmul.f32.gmra.mxu0 %v493
        %v682 = vpop.f32.mrf.mxu0
        %v683 = vadd.f32 0.0, %v682
        %684 = vmatmul.f32.gmra.mxu0 %v495
        %v685 = vpop.f32.mrf.mxu0
        %v686 = vadd.f32 0.0, %v685
        %687 = vmatmul.f32.gmra.mxu0 %v497
        %v688 = vpop.f32.mrf.mxu0
        %v689 = vadd.f32 0.0, %v688
        %690 = vmatmul.f32.gmra.mxu0 %v499
        %v691 = vpop.f32.mrf.mxu0
        %v692 = vadd.f32 0.0, %v691
        %693 = vmatmul.f32.gmra.mxu0 %v501
        %v694 = vpop.f32.mrf.mxu0
        %v695 = vadd.f32 0.0, %v694
        %696 = vmatmul.f32.gmra.mxu0 %v503
        %v697 = vpop.f32.mrf.mxu0
        %v698 = vadd.f32 0.0, %v697
        %699 = vdwg.mxu0
        %700 = vmatpush.xpose.msra.mxu0 %v472
        %701 = vmatpush.xpose.msra.mxu0 %v470
        %702 = vmatpush.xpose.msra.mxu0 %v468
        %703 = vmatpush.xpose.msra.mxu0 %v466
        %704 = vmatpush.xpose.msra.mxu0 %v464
        %705 = vmatpush.xpose.msra.mxu0 %v462
        %706 = vmatpush.xpose.msra.mxu0 %v460
        %707 = vmatpush.xpose.msra.mxu0 %v458
        %708 = vmatpush.xpose.msra.mxu0 %v456
        %709 = vmatpush.xpose.msra.mxu0 %v454
        %710 = vmatpush.xpose.msra.mxu0 %v452
        %711 = vmatpush.xpose.msra.mxu0 %v450
        %712 = vmatpush.xpose.msra.mxu0 %v448
        %713 = vmatpush.xpose.msra.mxu0 %v446
        %714 = vmatpush.xpose.msra.mxu0 %v444
        %715 = vmatpush.xpose.msra.mxu0 %v442
        %716 = vmatmul.f32.gmra.mxu0 %v474
        %v717 = vpop.f32.mrf.mxu0
        %v718 = vadd.f32 %v653, %v717
        %719 = vmatmul.f32.gmra.mxu0 %v476
        %v720 = vpop.f32.mrf.mxu0
        %v721 = vadd.f32 %v656, %v720
        %722 = vmatmul.f32.gmra.mxu0 %v478
        %v723 = vpop.f32.mrf.mxu0
        %v724 = vadd.f32 %v659, %v723
        %725 = vmatmul.f32.gmra.mxu0 %v480
        %v726 = vpop.f32.mrf.mxu0
        %v727 = vadd.f32 %v662, %v726
        %728 = vmatmul.f32.gmra.mxu0 %v482
        %v729 = vpop.f32.mrf.mxu0
        %v730 = vadd.f32 %v665, %v729
        %731 = vmatmul.f32.gmra.mxu0 %v484
        %v732 = vpop.f32.mrf.mxu0
        %v733 = vadd.f32 %v668, %v732
        %734 = vmatmul.f32.gmra.mxu0 %v486
        %v735 = vpop.f32.mrf.mxu0
        %v736 = vadd.f32 %v671, %v735
        %737 = vmatmul.f32.gmra.mxu0 %v488
        %v738 = vpop.f32.mrf.mxu0
        %v739 = vadd.f32 %v674, %v738
        %740 = vmatmul.f32.gmra.mxu0 %v490
        %v741 = vpop.f32.mrf.mxu0
        %v742 = vadd.f32 %v677, %v741
        %743 = vmatmul.f32.gmra.mxu0 %v492
        %v744 = vpop.f32.mrf.mxu0
        %v745 = vadd.f32 %v680, %v744
        %746 = vmatmul.f32.gmra.mxu0 %v494
        %v747 = vpop.f32.mrf.mxu0
        %v748 = vadd.f32 %v683, %v747
        %749 = vmatmul.f32.gmra.mxu0 %v496
        %v750 = vpop.f32.mrf.mxu0
        %v751 = vadd.f32 %v686, %v750
        %752 = vmatmul.f32.gmra.mxu0 %v498
        %v753 = vpop.f32.mrf.mxu0
        %v754 = vadd.f32 %v689, %v753
        %755 = vmatmul.f32.gmra.mxu0 %v500
        %v756 = vpop.f32.mrf.mxu0
        %v757 = vadd.f32 %v692, %v756
        %758 = vmatmul.f32.gmra.mxu0 %v502
        %v759 = vpop.f32.mrf.mxu0
        %v760 = vadd.f32 %v695, %v759
        %761 = vmatmul.f32.gmra.mxu0 %v504
        %v762 = vpop.f32.mrf.mxu0
        %v763 = vadd.f32 %v698, %v762
        %764 = vdwg.mxu0
        %v765 = vld [vmem:[%s213] sm:$0xff]
        %v766 = vld [vmem:[%s213 + $0x8] sm:$0xff]
        %v767 = vld [vmem:[%s213 + $0x10] sm:$0xff]
        %v768 = vld [vmem:[%s213 + $0x18] sm:$0xff]
        %v769 = vld [vmem:[%s213 + $0x20] sm:$0xff]
        %v770 = vld [vmem:[%s213 + $0x28] sm:$0xff]
        %v771 = vld [vmem:[%s213 + $0x30] sm:$0xff]
        %v772 = vld [vmem:[%s213 + $0x38] sm:$0xff]
        %v773 = vld [vmem:[%s213 + $0x40] sm:$0xff]
        %v774 = vld [vmem:[%s213 + $0x48] sm:$0xff]
        %v775 = vld [vmem:[%s213 + $0x50] sm:$0xff]
        %v776 = vld [vmem:[%s213 + $0x58] sm:$0xff]
        %v777 = vld [vmem:[%s213 + $0x60] sm:$0xff]
        %v778 = vld [vmem:[%s213 + $0x68] sm:$0xff]
        %v779 = vld [vmem:[%s213 + $0x70] sm:$0xff]
        %v780 = vld [vmem:[%s213 + $0x78] sm:$0xff]
        %781 = vmatpush.xpose.msra.mxu0 %v633
        %782 = vmatpush.xpose.msra.mxu0 %v630
        %783 = vmatpush.xpose.msra.mxu0 %v627
        %784 = vmatpush.xpose.msra.mxu0 %v624
        %785 = vmatpush.xpose.msra.mxu0 %v621
        %786 = vmatpush.xpose.msra.mxu0 %v618
        %787 = vmatpush.xpose.msra.mxu0 %v615
        %788 = vmatpush.xpose.msra.mxu0 %v612
        %789 = vmatpush.xpose.msra.mxu0 %v609
        %790 = vmatpush.xpose.msra.mxu0 %v606
        %791 = vmatpush.xpose.msra.mxu0 %v603
        %792 = vmatpush.xpose.msra.mxu0 %v600
        %793 = vmatpush.xpose.msra.mxu0 %v597
        %794 = vmatpush.xpose.msra.mxu0 %v594
        %795 = vmatpush.xpose.msra.mxu0 %v591
        %796 = vmatpush.xpose.msra.mxu0 %v588
        %797 = vmatmul.f32.gmra.mxu0 %v588
        %v798 = vpop.f32.mrf.mxu0
        %v799 = vadd.f32 0.0, %v798
        %800 = vmatmul.f32.gmra.mxu0 %v591
        %v801 = vpop.f32.mrf.mxu0
        %v802 = vadd.f32 0.0, %v801
        %803 = vmatmul.f32.gmra.mxu0 %v594
        %v804 = vpop.f32.mrf.mxu0
        %v805 = vadd.f32 0.0, %v804
        %806 = vmatmul.f32.gmra.mxu0 %v597
        %v807 = vpop.f32.mrf.mxu0
        %v808 = vadd.f32 0.0, %v807
        %809 = vmatmul.f32.gmra.mxu0 %v600
        %v810 = vpop.f32.mrf.mxu0
        %v811 = vadd.f32 0.0, %v810
        %812 = vmatmul.f32.gmra.mxu0 %v603
        %v813 = vpop.f32.mrf.mxu0
        %v814 = vadd.f32 0.0, %v813
        %815 = vmatmul.f32.gmra.mxu0 %v606
        %v816 = vpop.f32.mrf.mxu0
        %v817 = vadd.f32 0.0, %v816
        %818 = vmatmul.f32.gmra.mxu0 %v609
        %v819 = vpop.f32.mrf.mxu0
        %v820 = vadd.f32 0.0, %v819
        %821 = vmatmul.f32.gmra.mxu0 %v612
        %v822 = vpop.f32.mrf.mxu0
        %v823 = vadd.f32 0.0, %v822
        %824 = vmatmul.f32.gmra.mxu0 %v615
        %v825 = vpop.f32.mrf.mxu0
        %v826 = vadd.f32 0.0, %v825
        %827 = vmatmul.f32.gmra.mxu0 %v618
        %v828 = vpop.f32.mrf.mxu0
        %v829 = vadd.f32 0.0, %v828
        %830 = vmatmul.f32.gmra.mxu0 %v621
        %v831 = vpop.f32.mrf.mxu0
        %v832 = vadd.f32 0.0, %v831
        %833 = vmatmul.f32.gmra.mxu0 %v624
        %v834 = vpop.f32.mrf.mxu0
        %v835 = vadd.f32 0.0, %v834
        %836 = vmatmul.f32.gmra.mxu0 %v627
        %v837 = vpop.f32.mrf.mxu0
        %v838 = vadd.f32 0.0, %v837
        %839 = vmatmul.f32.gmra.mxu0 %v630
        %v840 = vpop.f32.mrf.mxu0
        %v841 = vadd.f32 0.0, %v840
        %842 = vmatmul.f32.gmra.mxu0 %v633
        %v843 = vpop.f32.mrf.mxu0
        %v844 = vadd.f32 0.0, %v843
        %845 = vdwg.mxu0
        %846 = vmatpush.xpose.msra.mxu0 %v763
        %847 = vmatpush.xpose.msra.mxu0 %v760
        %848 = vmatpush.xpose.msra.mxu0 %v757
        %849 = vmatpush.xpose.msra.mxu0 %v754
        %850 = vmatpush.xpose.msra.mxu0 %v751
        %851 = vmatpush.xpose.msra.mxu0 %v748
        %852 = vmatpush.xpose.msra.mxu0 %v745
        %853 = vmatpush.xpose.msra.mxu0 %v742
        %854 = vmatpush.xpose.msra.mxu0 %v739
        %855 = vmatpush.xpose.msra.mxu0 %v736
        %856 = vmatpush.xpose.msra.mxu0 %v733
        %857 = vmatpush.xpose.msra.mxu0 %v730
        %858 = vmatpush.xpose.msra.mxu0 %v727
        %859 = vmatpush.xpose.msra.mxu0 %v724
        %860 = vmatpush.xpose.msra.mxu0 %v721
        %861 = vmatpush.xpose.msra.mxu0 %v718
        %862 = vmatmul.f32.gmra.mxu0 %v718
        %v863 = vpop.f32.mrf.mxu0
        %v864 = vadd.f32 %v799, %v863
        %865 = vmatmul.f32.gmra.mxu0 %v721
        %v866 = vpop.f32.mrf.mxu0
        %v867 = vadd.f32 %v802, %v866
        %868 = vmatmul.f32.gmra.mxu0 %v724
        %v869 = vpop.f32.mrf.mxu0
        %v870 = vadd.f32 %v805, %v869
        %871 = vmatmul.f32.gmra.mxu0 %v727
        %v872 = vpop.f32.mrf.mxu0
        %v873 = vadd.f32 %v808, %v872
        %874 = vmatmul.f32.gmra.mxu0 %v730
        %v875 = vpop.f32.mrf.mxu0
        %v876 = vadd.f32 %v811, %v875
        %877 = vmatmul.f32.gmra.mxu0 %v733
        %v878 = vpop.f32.mrf.mxu0
        %v879 = vadd.f32 %v814, %v878
        %880 = vmatmul.f32.gmra.mxu0 %v736
        %v881 = vpop.f32.mrf.mxu0
        %v882 = vadd.f32 %v817, %v881
        %883 = vmatmul.f32.gmra.mxu0 %v739
        %v884 = vpop.f32.mrf.mxu0
        %v885 = vadd.f32 %v820, %v884
        %886 = vmatmul.f32.gmra.mxu0 %v742
        %v887 = vpop.f32.mrf.mxu0
        %v888 = vadd.f32 %v823, %v887
        %889 = vmatmul.f32.gmra.mxu0 %v745
        %v890 = vpop.f32.mrf.mxu0
        %v891 = vadd.f32 %v826, %v890
        %892 = vmatmul.f32.gmra.mxu0 %v748
        %v893 = vpop.f32.mrf.mxu0
        %v894 = vadd.f32 %v829, %v893
        %895 = vmatmul.f32.gmra.mxu0 %v751
        %v896 = vpop.f32.mrf.mxu0
        %v897 = vadd.f32 %v832, %v896
        %898 = vmatmul.f32.gmra.mxu0 %v754
        %v899 = vpop.f32.mrf.mxu0
        %v900 = vadd.f32 %v835, %v899
        %901 = vmatmul.f32.gmra.mxu0 %v757
        %v902 = vpop.f32.mrf.mxu0
        %v903 = vadd.f32 %v838, %v902
        %904 = vmatmul.f32.gmra.mxu0 %v760
        %v905 = vpop.f32.mrf.mxu0
        %v906 = vadd.f32 %v841, %v905
        %907 = vmatmul.f32.gmra.mxu0 %v763
        %v908 = vpop.f32.mrf.mxu0
        %v909 = vadd.f32 %v844, %v908
        %910 = vdwg.mxu0
        %v911 = vadd.f32 %v765, %v864
        %v912 = vadd.f32 %v766, %v867
        %v913 = vadd.f32 %v767, %v870
        %v914 = vadd.f32 %v768, %v873
        %v915 = vadd.f32 %v769, %v876
        %v916 = vadd.f32 %v770, %v879
        %v917 = vadd.f32 %v771, %v882
        %v918 = vadd.f32 %v772, %v885
        %v919 = vadd.f32 %v773, %v888
        %v920 = vadd.f32 %v774, %v891
        %v921 = vadd.f32 %v775, %v894
        %v922 = vadd.f32 %v776, %v897
        %v923 = vadd.f32 %v777, %v900
        %v924 = vadd.f32 %v778, %v903
        %v925 = vadd.f32 %v779, %v906
        %v926 = vadd.f32 %v780, %v909
        %927 = vst [vmem:[%s213] sm:$0xff] %v911
        %928 = vst [vmem:[%s213 + $0x8] sm:$0xff] %v912
        %929 = vst [vmem:[%s213 + $0x10] sm:$0xff] %v913
        %930 = vst [vmem:[%s213 + $0x18] sm:$0xff] %v914
        %931 = vst [vmem:[%s213 + $0x20] sm:$0xff] %v915
        %932 = vst [vmem:[%s213 + $0x28] sm:$0xff] %v916
        %933 = vst [vmem:[%s213 + $0x30] sm:$0xff] %v917
        %934 = vst [vmem:[%s213 + $0x38] sm:$0xff] %v918
        %935 = vst [vmem:[%s213 + $0x40] sm:$0xff] %v919
        %936 = vst [vmem:[%s213 + $0x48] sm:$0xff] %v920
        %937 = vst [vmem:[%s213 + $0x50] sm:$0xff] %v921
        %938 = vst [vmem:[%s213 + $0x58] sm:$0xff] %v922
        %939 = vst [vmem:[%s213 + $0x60] sm:$0xff] %v923
        %940 = vst [vmem:[%s213 + $0x68] sm:$0xff] %v924
        %941 = vst [vmem:[%s213 + $0x70] sm:$0xff] %v925
        %942 = vst [vmem:[%s213 + $0x78] sm:$0xff] %v926
        %s943 = sand.u32 %s95, 1
        %s944 = scalar_lea.sflag [#allocation4], %s943
        %s945 = sand.u32 %s95, 1
        %s946 = smul.addr %s945, 128
        %s947 = scalar_lea.vmem [#allocation7], %s946
        // Predicated region
        $region41: #{tpu_custom_call.1} parent=27 // pred_check
          %p948 = pneg %p105
        $region42: #{tpu_custom_call.1} parent=27 // pred_check_branch
          %950 = sbr.rel (%p948) target = $region44
        $region43: #{tpu_custom_call.1} parent=27 // pred_region
          %952 = vsyncadd %s944, 0
          %s953 = smul.addr %s24, 16
          %s954 = smul.addr %s953, 8
          %s955 = scalar_lea.hbm %s2, %s954
          %s956 = sshll.u32 %s947, 4
          %s957 = int_to_ptr.vmem [resolvable:$true] %s956
          %s958 = sshll.u32 %s955, 4
          %s959 = int_to_ptr.hbm [resolvable:$true] %s958
          %964 = dma.vmem_to_hbm [thread:$0]  %s957, 2048, %s959, %s944, 128, 128, 8
        $region44: #{tpu_custom_call.1} parent=27 // pred_fallthru
          _
      $region28: #{tpu_custom_call.1} parent=5 // pred_fallthru
        _
      %p965 = scmp.le.s32.totalorder 2, %s15
      // Predicated region
      $region45: #{tpu_custom_call.1} parent=5 // pred_check
        %p966 = pneg %p965
      $region46: #{tpu_custom_call.1} parent=5 // pred_check_branch
        %968 = sbr.rel (%p966) target = $region48
      $region47: #{tpu_custom_call.1} parent=5 // pred_region
        %s969 = ssub.s32 %s15, 2
        // Predicated region
        $region49: #{tpu_custom_call.1} parent=47 // pred_check
          %p970 = pneg %p111
        $region50: #{tpu_custom_call.1} parent=47 // pred_check_branch
          %972 = sbr.rel (%p970) target = $region52
        $region51: #{tpu_custom_call.1} parent=47 // pred_region
          %s973 = sand.u32 %s96, 1
          %s974 = scalar_lea.sflag [#allocation4], %s973
          %s975 = sand.u32 %s96, 1
          %s976 = smul.addr %s975, 128
          %s977 = scalar_lea.vmem [#allocation7], %s976
          %979 = dma.done %s974, 2048
        $region52: #{tpu_custom_call.1} parent=47 // pred_fallthru
          _
      $region48: #{tpu_custom_call.1} parent=5 // pred_fallthru
        _
    $region6: #{tpu_custom_call.1} parent=1 // loop_footer
      %s19 = sadd.s32 1, %s15
    $region7: #{tpu_custom_call.1} parent=1 // loop_footer_branch
      %14 = sbr.rel target = $region3
    $region8: #{tpu_custom_call.1} parent=1 // loop_exit
      _
    %980 = vsyncpa [#allocation3], 1
    %s981 = scalar_lea.sflag [#allocation3], 1
    %982 = vsyncpa %s981, 1
    %983 = vsyncpa [#allocation6], 1
    %s984 = scalar_lea.sflag [#allocation6], 1
    %985 = vsyncpa %s984, 1
    %986 = vsyncpa [#allocation4], 1
    %s987 = scalar_lea.sflag [#allocation4], 1
    %988 = vsyncpa %s987, 1

</llo_original>
